<compile_context>
chip_gen: v5e
topology: v5e:2x2
jax: 0.10.0
libtpu: 0.0.40
codegen_flags: <defaults>
</compile_context>

<pallas_src>
import jax
import jax.numpy as jnp
from jax import lax
from jax.experimental import pallas as pl
from jax.experimental.pallas import tpu as pltpu


def _round_up(x: int, m: int) -> int:
    return ((x + m - 1) // m) * m


def _cdiv(a: int, b: int) -> int:
    return (a + b - 1) // b


def _balanced_tile(dim: int, max_tile: int, align: int) -> int:
    """Largest aligned tile <= ~max_tile that keeps padding under one tile."""
    n_tiles = max(1, _cdiv(dim, max_tile))
    return _round_up(_cdiv(dim, n_tiles), align)


# ----------------------------------------------------------------------------- kernels
def _make_single_k_kernel(precision):
    """E fits in one tk block: no K axis, no pl.when, no accumulator."""

    def kernel(x_ref, w_ref, b_ref, o_ref):
        o_ref[...] = (
            jnp.dot(
                x_ref[...],
                w_ref[...],
                preferred_element_type=jnp.float32,
                precision=precision,
            )
            + b_ref[...]
        ).astype(o_ref.dtype)

    return kernel


def _make_ksplit_kernel(precision):
    """K-tiled path: accumulate directly into the resident f32 output block."""

    def kernel(x_ref, w_ref, b_ref, o_ref):
        k = pl.program_id(2)

        @pl.when(k == 0)
        def _init():
            o_ref[...] = jnp.zeros_like(o_ref)

        o_ref[...] += jnp.dot(
            x_ref[...],
            w_ref[...],
            preferred_element_type=jnp.float32,
            precision=precision,
        )

        @pl.when(k == pl.num_programs(2) - 1)
        def _finalize():
            o_ref[...] += b_ref[...]  # bias added exactly once

    return kernel


# ---------------------------------------------------------------------- parameter prep
def prepare_fc_params(weight, bias, *, tn_max=512, tk_max=2048, ensure_two_n_tiles=True):
    """One-time (parameter-load-time) prep: pick tn/tk, pad + pre-transpose the weight.

    weight: (out_size, embedding_dim) — native PyTorch layout.
    bias:   (out_size,)
    Returns a dict consumed by fc_layer_forward. Only the activation is ever padded
    per call; the weight copy/transpose here is paid once, not per forward.
    """
    O, E = weight.shape
    assert bias.shape == (O,)

    tn = _balanced_tile(O, tn_max, 128)
    tk = _balanced_tile(E, tk_max, 128)

    # v7x has 2 TensorCores: guarantee >= 2 parallel (i, j) tiles for small-batch
    # inference (grid would otherwise be (1, 1, K) and leave one TC idle).
    if ensure_two_n_tiles and _cdiv(O, tn) == 1 and _round_up(O, 128) >= 256:
        tn = _round_up(_cdiv(O, 2), 128)

    Np = _cdiv(O, tn) * tn
    Kp = _cdiv(E, tk) * tk

    # Pre-transpose to (E, O): kernel does a plain [M,K]x[K,N] contraction in the
    # natural lane-dense layout (no per-K-step XLU transpose of the weight tile).
    w_t = weight.T
    if Kp != E or Np != O:
        w_t = jnp.pad(w_t, ((0, Kp - E), (0, Np - O)))
    b_p = bias if Np == O else jnp.pad(bias, (0, Np - O))
    b2d = b_p.reshape(1, Np)

    return dict(w_t=w_t, b2d=b2d, tn=tn, tk=tk, E=E, O=O, Np=Np, Kp=Kp)


# --------------------------------------------------------------------------- forward
def fc_layer_forward(x, params, *, tm_max=512, buffer_count=2,
                     precision=lax.Precision.HIGHEST):
    """y = x @ weight.T + bias, with weight/bias pre-prepared by prepare_fc_params."""
    B, E = x.shape
    assert E == params["E"], "x inner dim must match embedding_dim"
    assert x.dtype == jnp.float32, "kernel accumulates into the f32 output block"

    tn, tk, O, Np, Kp = (params[k] for k in ("tn", "tk", "O", "Np", "Kp"))
    w_t, b2d = params["w_t"], params["b2d"]

    tm = _balanced_tile(B, tm_max, 8)

    itemsize = 4  # f32

    def footprint(tm_):
        # x + w + bias blocks (each multi-buffered) + double-buffered output block.
        blk_in = (tm_ * tk + tk * tn + 8 * tn) * itemsize  # bias pads to 8 sublanes
        return buffer_count * blk_in + 2 * tm_ * tn * itemsize

    # Keep the pipelined footprint comfortably inside v7x's 64 MiB VMEM.
    while footprint(tm) > (40 << 20) and tm > 8:
        tm = max(8, _round_up(tm // 2, 8))

    Mp = _cdiv(B, tm) * tm
    xp = x if (Mp == B and Kp == E) else jnp.pad(x, ((0, Mp - B), (0, Kp - E)))

    m_tiles, n_tiles, k_steps = Mp // tm, Np // tn, Kp // tk

    # Actual footprint + headroom for Mosaic internal scratch; no 32 MiB clamp,
    # capped at 48 MiB so the largest tiles still fit on v7x (64 MiB physical).
    vmem_limit = int(min(max(footprint(tm) * 5 // 4 + (4 << 20), 24 << 20), 48 << 20))

    def in_spec(shape, idx):
        if buffer_count != 2:  # e.g. 3-deep pipelining on bandwidth-poor v5e
            return pl.BlockSpec(shape, idx, pipeline_mode=pl.Buffered(buffer_count))
        return pl.BlockSpec(shape, idx)

    if k_steps == 1:
        kernel = _make_single_k_kernel(precision)
        grid = (m_tiles, n_tiles)
        in_specs = [
            in_spec((tm, tk), lambda i, j: (i, 0)),   # x
            in_spec((tk, tn), lambda i, j: (0, j)),   # weight (pre-transposed, (K, N))
            pl.BlockSpec((1, tn), lambda i, j: (0, j)),  # bias
        ]
        out_spec = pl.BlockSpec((tm, tn), lambda i, j: (i, j))
        dims = ("parallel", "parallel")
    else:
        kernel = _make_ksplit_kernel(precision)
        grid = (m_tiles, n_tiles, k_steps)
        in_specs = [
            in_spec((tm, tk), lambda i, j, k: (i, k)),   # x
            in_spec((tk, tn), lambda i, j, k: (k, j)),   # weight (pre-transposed)
            pl.BlockSpec((1, tn), lambda i, j, k: (0, j)),  # bias
        ]
        out_spec = pl.BlockSpec((tm, tn), lambda i, j, k: (i, j))
        dims = ("parallel", "parallel", "arbitrary")

    out = pl.pallas_call(
        kernel,
        out_shape=jax.ShapeDtypeStruct((Mp, Np), x.dtype),
        grid_spec=pltpu.PrefetchScalarGridSpec(
            num_scalar_prefetch=0,
            grid=grid,
            in_specs=in_specs,
            out_specs=out_spec,
        ),
        compiler_params=pltpu.CompilerParams(
            dimension_semantics=dims,
            vmem_limit_bytes=vmem_limit,
        ),
    )(xp, w_t, b2d)

    if Mp != B or Np != O:
        out = out[:B, :O]
    return out


def fc_layer(x, weight, bias, **kwargs):
    """Convenience one-shot wrapper matching the PyTorch module's forward."""
    return fc_layer_forward(x, prepare_fc_params(weight, bias), **kwargs)


# ------------------------------------------------------------------------------ tests
if __name__ == "__main__":
    key = jax.random.PRNGKey(0)

    def init_linear(k, in_f, out_f):
        kw, kb = jax.random.split(k)
        bound = 1.0 / jnp.sqrt(in_f)
        w = jax.random.uniform(kw, (out_f, in_f), jnp.float32, -bound, bound)
        b = jax.random.uniform(kb, (out_f,), jnp.float32, -bound, bound)
        return w, b

    # Test 1: toy shapes consistent with the module (batch=8, E=32, out=16).
    # Exercises the single-K fast path (2-D grid, no accumulator).
    k1, k2, key = jax.random.split(key, 3)
    B, E, O = 8, 32, 16
    w, b = init_linear(k1, E, O)
    x = jax.random.normal(k2, (B, E), jnp.float32)
    params = prepare_fc_params(w, b)
    out = jax.block_until_ready(fc_layer_forward(x, params))
    ref = jnp.dot(x, w.T, precision=lax.Precision.HIGHEST) + b
    assert out.shape == (B, O)
    assert jnp.allclose(out, ref, atol=1e-4, rtol=1e-4), "mismatch vs reference (test 1)"

    # Test 2: misaligned shapes — exercises activation padding, balanced tiling,
    # the >=2-N-tile split and the K-accumulation path (tk_max forced small).
    k3, k4 = jax.random.split(key)
    B, E, O = 200, 512, 200
    w, b = init_linear(k3, E, O)
    x = jax.random.normal(k4, (B, E), jnp.float32)
    params = prepare_fc_params(w, b, tk_max=256)
    out = jax.block_until_ready(fc_layer_forward(x, params))
    ref = jnp.dot(x, w.T, precision=lax.Precision.HIGHEST) + b
    assert out.shape == (B, O)
    assert jnp.allclose(out, ref, atol=1e-4, rtol=1e-4), "mismatch vs reference (test 2)"

    print("KERNEL_OK")
</pallas_src>

<mosaic_0001>
module attributes {stable_mosaic.version = 11 : i64} {
  func.func @kernel(%arg0: i32, %arg1: i32, %arg2: memref<8x128xf32, #tpu.memory_space<vmem>>, %arg3: memref<128x128xf32, #tpu.memory_space<vmem>>, %arg4: memref<1x128xf32, #tpu.memory_space<vmem>>, %arg5: memref<8x128xf32, #tpu.memory_space<vmem>>) attributes {dimension_semantics = [#tpu.dimension_semantics<parallel>, #tpu.dimension_semantics<parallel>], iteration_bounds = array<i64: 1, 1>, scalar_prefetch = 0 : i64, scratch_operands = 0 : i64, tpu.core_type = #tpu.core_type<tc>, window_params = [{transform_indices = @transform_0, window_bounds = array<i64: 8, 128>}, {transform_indices = @transform_1, window_bounds = array<i64: 128, 128>}, {transform_indices = @transform_2, window_bounds = array<i64: 1, 128>}, {transform_indices = @transform_3, window_bounds = array<i64: 8, 128>}]} {
    %c0 = arith.constant 0 : index
    %c0_0 = arith.constant 0 : index
    %0 = vector.load %arg2[%c0, %c0_0] : memref<8x128xf32, #tpu.memory_space<vmem>>, vector<8x128xf32>
    %c0_1 = arith.constant 0 : index
    %c0_2 = arith.constant 0 : index
    %1 = vector.load %arg3[%c0_1, %c0_2] : memref<128x128xf32, #tpu.memory_space<vmem>>, vector<128x128xf32>
    %cst = arith.constant dense<0.000000e+00> : vector<8x128xf32>
    %2 = tpu.matmul %0, %1, %cst {dimension_numbers = #tpu.dot_dimension_numbers<[1], [0], [0], [1], [0, 0, 1, 1], [], []>, precision = #tpu.contract_precision<fp32>} : vector<8x128xf32>, vector<128x128xf32>, vector<8x128xf32> -> vector<8x128xf32>
    %c0_3 = arith.constant 0 : index
    %c0_4 = arith.constant 0 : index
    %3 = vector.load %arg4[%c0_3, %c0_4] : memref<1x128xf32, #tpu.memory_space<vmem>>, vector<1x128xf32>
    %4 = vector.broadcast %3 : vector<1x128xf32> to vector<8x128xf32>
    %5 = arith.addf %2, %4 : vector<8x128xf32>
    %c0_5 = arith.constant 0 : index
    %c0_6 = arith.constant 0 : index
    %6 = vector.load %arg5[%c0_5, %c0_6] : memref<8x128xf32, #tpu.memory_space<vmem>>, vector<8x128xf32>
    tpu.vector_store %arg5[%c0_5, %c0_6], %5 {strides = array<i32>} : memref<8x128xf32, #tpu.memory_space<vmem>>, vector<8x128xf32>,
    return
  }
  func.func @transform_0(%arg0: i32, %arg1: i32) -> (i32, i32) {
    %c0_i32 = arith.constant 0 : i32
    %c0_i32_0 = arith.constant 0 : i32
    return %arg0, %c0_i32 : i32, i32
  }
  func.func @transform_1(%arg0: i32, %arg1: i32) -> (i32, i32) {
    %c0_i32 = arith.constant 0 : i32
    %c0_i32_0 = arith.constant 0 : i32
    return %c0_i32, %arg1 : i32, i32
  }
  func.func @transform_2(%arg0: i32, %arg1: i32) -> (i32, i32) {
    %c0_i32 = arith.constant 0 : i32
    %c0_i32_0 = arith.constant 0 : i32
    return %c0_i32, %arg1 : i32, i32
  }
  func.func @transform_3(%arg0: i32, %arg1: i32) -> (i32, i32) {
    %c0_i32 = arith.constant 0 : i32
    return %arg0, %arg1 : i32, i32
  }
}

</mosaic_0001>

<llo_original>
// kernel: tpu_custom_call.1
$region0: #{tpu_custom_call.1}
  #allocation0 [shape = 'u32[]', space=smem, size = 0x4, offset = 0x4, fixed_abs, tag = 'smem constant byte address 0x4 - core index']
  #allocation1 [shape = 'u32[72,128]{1,0:T(1,128)}', space=vmem, size = 0x9000, scoped, tag = 'internal scratch']
  %s0 = inlined_call_operand.hbm [shape: f32[8,128], index: 0, kind: input, shape index: {}]
  %s1 = inlined_call_operand.hbm [shape: f32[128,128], index: 1, kind: input, shape index: {}]
  %s2 = inlined_call_operand.vmem [shape: f32[1,128], index: 2, kind: input, shape index: {}]
  %s3 = inlined_call_operand.hbm [shape: f32[8,128], index: 3, kind: output, shape index: {}]
  %s4 = sld [smem:[#allocation0]]
  $region30: #{tpu_custom_call.1} parent=0
    _
  %s6 = ssub.s32 1, %s4
  %s7 = scalar_select 0, %s6, %s4
  $region1: #{tpu_custom_call.1} parent=0
    #allocation2 [shape = 'u8[4096]{0}', space=vmem, size = 0x1000, scoped, tag = 'input window, operand 0, single buffered']
    #allocation3 [shape = 's32[1]{0}', space=sflag, size = 0x4, scoped, tag = 'scoped memory for tpu_custom_call.1']
    #allocation4 [shape = 's32[1]{0}', space=sflag, size = 0x4, scoped, tag = 'scoped memory for tpu_custom_call.1']
    #allocation5 [shape = 'u8[65536]{0}', space=vmem, size = 0x10000, scoped, tag = 'input window, operand 1, single buffered']
    #allocation6 [shape = 's32[1]{0}', space=sflag, size = 0x4, scoped, tag = 'scoped memory for tpu_custom_call.1']
    #allocation7 [shape = 'u8[4096]{0}', space=vmem, size = 0x1000, scoped, tag = 'output window, operand 0, single buffered']
    %8 = vsyncpa [#allocation3], 0
    %9 = vsyncpa [#allocation6], 0
    %10 = vsyncpa [#allocation4], 0
    // Predicated region
    $region2: #{tpu_custom_call.1} parent=1 // pred_check
      _
    $region3: #{tpu_custom_call.1} parent=1 // pred_check_branch
      %12 = sbr.rel (0) target = $region5
    $region4: #{tpu_custom_call.1} parent=1 // pred_region
      %14 = vsyncadd [#allocation3], 0
      %s16 = sshll.u32 %s0, 4
      %s17 = int_to_ptr.hbm [resolvable:$true] %s16
      %s18 = sshll.u32 [#allocation2], 4
      %s19 = int_to_ptr.vmem [resolvable:$true] %s18
      %21 = dma.hbm_to_vmem [thread:$0]  %s17, 128, %s19, [#allocation3]
    $region5: #{tpu_custom_call.1} parent=1 // pred_fallthru
      _
    // Predicated region
    $region6: #{tpu_custom_call.1} parent=1 // pred_check
      _
    $region7: #{tpu_custom_call.1} parent=1 // pred_check_branch
      %23 = sbr.rel (0) target = $region9
    $region8: #{tpu_custom_call.1} parent=1 // pred_region
      %25 = vsyncadd [#allocation6], 0
      %s26 = sshll.u32 %s1, 4
      %s27 = int_to_ptr.hbm [resolvable:$true] %s26
      %s28 = sshll.u32 [#allocation5], 4
      %s29 = int_to_ptr.vmem [resolvable:$true] %s28
      %34 = dma.hbm_to_vmem [thread:$0]  %s27, 2048, %s29, [#allocation6], 128, 128, 8
    $region9: #{tpu_custom_call.1} parent=1 // pred_fallthru
      _
    // Predicated region
    $region10: #{tpu_custom_call.1} parent=1 // pred_check
      _
    $region11: #{tpu_custom_call.1} parent=1 // pred_check_branch
      %36 = sbr.rel (0) target = $region13
    $region12: #{tpu_custom_call.1} parent=1 // pred_region
      _
    $region13: #{tpu_custom_call.1} parent=1 // pred_fallthru
      _
    // Predicated region
    $region14: #{tpu_custom_call.1} parent=1 // pred_check
      _
    $region15: #{tpu_custom_call.1} parent=1 // pred_check_branch
      %38 = sbr.rel (0) target = $region17
    $region16: #{tpu_custom_call.1} parent=1 // pred_region
      %40 = dma.done [#allocation3], 128
    $region17: #{tpu_custom_call.1} parent=1 // pred_fallthru
      _
    // Predicated region
    $region18: #{tpu_custom_call.1} parent=1 // pred_check
      _
    $region19: #{tpu_custom_call.1} parent=1 // pred_check_branch
      %42 = sbr.rel (0) target = $region21
    $region20: #{tpu_custom_call.1} parent=1 // pred_region
      %44 = dma.done [#allocation6], 2048
    $region21: #{tpu_custom_call.1} parent=1 // pred_fallthru
      _
    %v45 = vld [vmem:[#allocation2] sm:$0xff]
    %v46 = vld [vmem:[#allocation5] sm:$0xff]
    %v47 = vld [vmem:[#allocation5 + $0x8] sm:$0xff]
    %v48 = vld [vmem:[#allocation5 + $0x10] sm:$0xff]
    %v49 = vld [vmem:[#allocation5 + $0x18] sm:$0xff]
    %v50 = vld [vmem:[#allocation5 + $0x20] sm:$0xff]
    %v51 = vld [vmem:[#allocation5 + $0x28] sm:$0xff]
    %v52 = vld [vmem:[#allocation5 + $0x30] sm:$0xff]
    %v53 = vld [vmem:[#allocation5 + $0x38] sm:$0xff]
    %v54 = vld [vmem:[#allocation5 + $0x40] sm:$0xff]
    %v55 = vld [vmem:[#allocation5 + $0x48] sm:$0xff]
    %v56 = vld [vmem:[#allocation5 + $0x50] sm:$0xff]
    %v57 = vld [vmem:[#allocation5 + $0x58] sm:$0xff]
    %v58 = vld [vmem:[#allocation5 + $0x60] sm:$0xff]
    %v59 = vld [vmem:[#allocation5 + $0x68] sm:$0xff]
    %v60 = vld [vmem:[#allocation5 + $0x70] sm:$0xff]
    %v61 = vld [vmem:[#allocation5 + $0x78] sm:$0xff]
    %v62 = vld [vmem:[%s2] sm:$0x1]
    %v64 = vperm.slane %v62, 0
    %v66 = vand.u32 %v61, 4294901760
    %67 = vmatpush.msra.mxu0 %v66
    %v68 = vand.u32 %v60, 4294901760
    %69 = vmatpush.msra.mxu0 %v68
    %v70 = vand.u32 %v59, 4294901760
    %71 = vmatpush.msra.mxu0 %v70
    %v72 = vand.u32 %v58, 4294901760
    %73 = vmatpush.msra.mxu0 %v72
    %v74 = vand.u32 %v57, 4294901760
    %75 = vmatpush.msra.mxu0 %v74
    %v76 = vand.u32 %v56, 4294901760
    %77 = vmatpush.msra.mxu0 %v76
    %v78 = vand.u32 %v55, 4294901760
    %79 = vmatpush.msra.mxu0 %v78
    %v80 = vand.u32 %v54, 4294901760
    %81 = vmatpush.msra.mxu0 %v80
    %v82 = vand.u32 %v53, 4294901760
    %83 = vmatpush.msra.mxu0 %v82
    %v84 = vand.u32 %v52, 4294901760
    %85 = vmatpush.msra.mxu0 %v84
    %v86 = vand.u32 %v51, 4294901760
    %87 = vmatpush.msra.mxu0 %v86
    %v88 = vand.u32 %v50, 4294901760
    %89 = vmatpush.msra.mxu0 %v88
    %v90 = vand.u32 %v49, 4294901760
    %91 = vmatpush.msra.mxu0 %v90
    %v92 = vand.u32 %v48, 4294901760
    %93 = vmatpush.msra.mxu0 %v92
    %v94 = vand.u32 %v47, 4294901760
    %95 = vmatpush.msra.mxu0 %v94
    %v96 = vand.u32 %v46, 4294901760
    %97 = vmatpush.msra.mxu0 %v96
    %v98 = vand.u32 %v45, 4294901760
    %v99 = vsub.f32 %v45, %v98
    %v100 = vand.u32 %v99, 4294901760
    %v101 = vsub.f32 %v99, %v100
    %v102 = vand.u32 %v101, 4294901760
    %103 = vmatmul.f32.gmra.mxu0 %v102
    %v104 = vpop.f32.mrf.mxu0
    %v105 = vadd.f32 %v64, %v104
    %106 = vdwg.mxu0
    %v107 = vand.u32 %v61, 4294901760
    %v108 = vsub.f32 %v61, %v107
    %v109 = vand.u32 %v108, 4294901760
    %v110 = vsub.f32 %v108, %v109
    %v111 = vand.u32 %v110, 4294901760
    %112 = vmatpush.msra.mxu0 %v111
    %v113 = vand.u32 %v60, 4294901760
    %v114 = vsub.f32 %v60, %v113
    %v115 = vand.u32 %v114, 4294901760
    %v116 = vsub.f32 %v114, %v115
    %v117 = vand.u32 %v116, 4294901760
    %118 = vmatpush.msra.mxu0 %v117
    %v119 = vand.u32 %v59, 4294901760
    %v120 = vsub.f32 %v59, %v119
    %v121 = vand.u32 %v120, 4294901760
    %v122 = vsub.f32 %v120, %v121
    %v123 = vand.u32 %v122, 4294901760
    %124 = vmatpush.msra.mxu0 %v123
    %v125 = vand.u32 %v58, 4294901760
    %v126 = vsub.f32 %v58, %v125
    %v127 = vand.u32 %v126, 4294901760
    %v128 = vsub.f32 %v126, %v127
    %v129 = vand.u32 %v128, 4294901760
    %130 = vmatpush.msra.mxu0 %v129
    %v131 = vand.u32 %v57, 4294901760
    %v132 = vsub.f32 %v57, %v131
    %v133 = vand.u32 %v132, 4294901760
    %v134 = vsub.f32 %v132, %v133
    %v135 = vand.u32 %v134, 4294901760
    %136 = vmatpush.msra.mxu0 %v135
    %v137 = vand.u32 %v56, 4294901760
    %v138 = vsub.f32 %v56, %v137
    %v139 = vand.u32 %v138, 4294901760
    %v140 = vsub.f32 %v138, %v139
    %v141 = vand.u32 %v140, 4294901760
    %142 = vmatpush.msra.mxu0 %v141
    %v143 = vand.u32 %v55, 4294901760
    %v144 = vsub.f32 %v55, %v143
    %v145 = vand.u32 %v144, 4294901760
    %v146 = vsub.f32 %v144, %v145
    %v147 = vand.u32 %v146, 4294901760
    %148 = vmatpush.msra.mxu0 %v147
    %v149 = vand.u32 %v54, 4294901760
    %v150 = vsub.f32 %v54, %v149
    %v151 = vand.u32 %v150, 4294901760
    %v152 = vsub.f32 %v150, %v151
    %v153 = vand.u32 %v152, 4294901760
    %154 = vmatpush.msra.mxu0 %v153
    %v155 = vand.u32 %v53, 4294901760
    %v156 = vsub.f32 %v53, %v155
    %v157 = vand.u32 %v156, 4294901760
    %v158 = vsub.f32 %v156, %v157
    %v159 = vand.u32 %v158, 4294901760
    %160 = vmatpush.msra.mxu0 %v159
    %v161 = vand.u32 %v52, 4294901760
    %v162 = vsub.f32 %v52, %v161
    %v163 = vand.u32 %v162, 4294901760
    %v164 = vsub.f32 %v162, %v163
    %v165 = vand.u32 %v164, 4294901760
    %166 = vmatpush.msra.mxu0 %v165
    %v167 = vand.u32 %v51, 4294901760
    %v168 = vsub.f32 %v51, %v167
    %v169 = vand.u32 %v168, 4294901760
    %v170 = vsub.f32 %v168, %v169
    %v171 = vand.u32 %v170, 4294901760
    %172 = vmatpush.msra.mxu0 %v171
    %v173 = vand.u32 %v50, 4294901760
    %v174 = vsub.f32 %v50, %v173
    %v175 = vand.u32 %v174, 4294901760
    %v176 = vsub.f32 %v174, %v175
    %v177 = vand.u32 %v176, 4294901760
    %178 = vmatpush.msra.mxu0 %v177
    %v179 = vand.u32 %v49, 4294901760
    %v180 = vsub.f32 %v49, %v179
    %v181 = vand.u32 %v180, 4294901760
    %v182 = vsub.f32 %v180, %v181
    %v183 = vand.u32 %v182, 4294901760
    %184 = vmatpush.msra.mxu0 %v183
    %v185 = vand.u32 %v48, 4294901760
    %v186 = vsub.f32 %v48, %v185
    %v187 = vand.u32 %v186, 4294901760
    %v188 = vsub.f32 %v186, %v187
    %v189 = vand.u32 %v188, 4294901760
    %190 = vmatpush.msra.mxu0 %v189
    %v191 = vand.u32 %v47, 4294901760
    %v192 = vsub.f32 %v47, %v191
    %v193 = vand.u32 %v192, 4294901760
    %v194 = vsub.f32 %v192, %v193
    %v195 = vand.u32 %v194, 4294901760
    %196 = vmatpush.msra.mxu0 %v195
    %v197 = vand.u32 %v46, 4294901760
    %v198 = vsub.f32 %v46, %v197
    %v199 = vand.u32 %v198, 4294901760
    %v200 = vsub.f32 %v198, %v199
    %v201 = vand.u32 %v200, 4294901760
    %202 = vmatpush.msra.mxu0 %v201
    %v203 = vand.u32 %v45, 4294901760
    %204 = vmatmul.f32.gmra.mxu0 %v203
    %v205 = vpop.f32.mrf.mxu0
    %v206 = vadd.f32 %v105, %v205
    %207 = vdwg.mxu0
    %v208 = vand.u32 %v61, 4294901760
    %v209 = vsub.f32 %v61, %v208
    %210 = vmatpush.msra.mxu0 %v209
    %v211 = vand.u32 %v60, 4294901760
    %v212 = vsub.f32 %v60, %v211
    %213 = vmatpush.msra.mxu0 %v212
    %v214 = vand.u32 %v59, 4294901760
    %v215 = vsub.f32 %v59, %v214
    %216 = vmatpush.msra.mxu0 %v215
    %v217 = vand.u32 %v58, 4294901760
    %v218 = vsub.f32 %v58, %v217
    %219 = vmatpush.msra.mxu0 %v218
    %v220 = vand.u32 %v57, 4294901760
    %v221 = vsub.f32 %v57, %v220
    %222 = vmatpush.msra.mxu0 %v221
    %v223 = vand.u32 %v56, 4294901760
    %v224 = vsub.f32 %v56, %v223
    %225 = vmatpush.msra.mxu0 %v224
    %v226 = vand.u32 %v55, 4294901760
    %v227 = vsub.f32 %v55, %v226
    %228 = vmatpush.msra.mxu0 %v227
    %v229 = vand.u32 %v54, 4294901760
    %v230 = vsub.f32 %v54, %v229
    %231 = vmatpush.msra.mxu0 %v230
    %v232 = vand.u32 %v53, 4294901760
    %v233 = vsub.f32 %v53, %v232
    %234 = vmatpush.msra.mxu0 %v233
    %v235 = vand.u32 %v52, 4294901760
    %v236 = vsub.f32 %v52, %v235
    %237 = vmatpush.msra.mxu0 %v236
    %v238 = vand.u32 %v51, 4294901760
    %v239 = vsub.f32 %v51, %v238
    %240 = vmatpush.msra.mxu0 %v239
    %v241 = vand.u32 %v50, 4294901760
    %v242 = vsub.f32 %v50, %v241
    %243 = vmatpush.msra.mxu0 %v242
    %v244 = vand.u32 %v49, 4294901760
    %v245 = vsub.f32 %v49, %v244
    %246 = vmatpush.msra.mxu0 %v245
    %v247 = vand.u32 %v48, 4294901760
    %v248 = vsub.f32 %v48, %v247
    %249 = vmatpush.msra.mxu0 %v248
    %v250 = vand.u32 %v47, 4294901760
    %v251 = vsub.f32 %v47, %v250
    %252 = vmatpush.msra.mxu0 %v251
    %v253 = vand.u32 %v46, 4294901760
    %v254 = vsub.f32 %v46, %v253
    %255 = vmatpush.msra.mxu0 %v254
    %v256 = vand.u32 %v45, 4294901760
    %v257 = vsub.f32 %v45, %v256
    %258 = vmatmul.f32.gmra.mxu0 %v257
    %v259 = vpop.f32.mrf.mxu0
    %v260 = vadd.f32 %v206, %v259
    %261 = vdwg.mxu0
    %v262 = vand.u32 %v61, 4294901760
    %263 = vmatpush.msra.mxu0 %v262
    %v264 = vand.u32 %v60, 4294901760
    %265 = vmatpush.msra.mxu0 %v264
    %v266 = vand.u32 %v59, 4294901760
    %267 = vmatpush.msra.mxu0 %v266
    %v268 = vand.u32 %v58, 4294901760
    %269 = vmatpush.msra.mxu0 %v268
    %v270 = vand.u32 %v57, 4294901760
    %271 = vmatpush.msra.mxu0 %v270
    %v272 = vand.u32 %v56, 4294901760
    %273 = vmatpush.msra.mxu0 %v272
    %v274 = vand.u32 %v55, 4294901760
    %275 = vmatpush.msra.mxu0 %v274
    %v276 = vand.u32 %v54, 4294901760
    %277 = vmatpush.msra.mxu0 %v276
    %v278 = vand.u32 %v53, 4294901760
    %279 = vmatpush.msra.mxu0 %v278
    %v280 = vand.u32 %v52, 4294901760
    %281 = vmatpush.msra.mxu0 %v280
    %v282 = vand.u32 %v51, 4294901760
    %283 = vmatpush.msra.mxu0 %v282
    %v284 = vand.u32 %v50, 4294901760
    %285 = vmatpush.msra.mxu0 %v284
    %v286 = vand.u32 %v49, 4294901760
    %287 = vmatpush.msra.mxu0 %v286
    %v288 = vand.u32 %v48, 4294901760
    %289 = vmatpush.msra.mxu0 %v288
    %v290 = vand.u32 %v47, 4294901760
    %291 = vmatpush.msra.mxu0 %v290
    %v292 = vand.u32 %v46, 4294901760
    %293 = vmatpush.msra.mxu0 %v292
    %v294 = vand.u32 %v45, 4294901760
    %v295 = vsub.f32 %v45, %v294
    %v296 = vand.u32 %v295, 4294901760
    %297 = vmatmul.f32.gmra.mxu0 %v296
    %v298 = vpop.f32.mrf.mxu0
    %v299 = vadd.f32 %v260, %v298
    %300 = vdwg.mxu0
    %v301 = vand.u32 %v61, 4294901760
    %v302 = vsub.f32 %v61, %v301
    %v303 = vand.u32 %v302, 4294901760
    %304 = vmatpush.msra.mxu0 %v303
    %v305 = vand.u32 %v60, 4294901760
    %v306 = vsub.f32 %v60, %v305
    %v307 = vand.u32 %v306, 4294901760
    %308 = vmatpush.msra.mxu0 %v307
    %v309 = vand.u32 %v59, 4294901760
    %v310 = vsub.f32 %v59, %v309
    %v311 = vand.u32 %v310, 4294901760
    %312 = vmatpush.msra.mxu0 %v311
    %v313 = vand.u32 %v58, 4294901760
    %v314 = vsub.f32 %v58, %v313
    %v315 = vand.u32 %v314, 4294901760
    %316 = vmatpush.msra.mxu0 %v315
    %v317 = vand.u32 %v57, 4294901760
    %v318 = vsub.f32 %v57, %v317
    %v319 = vand.u32 %v318, 4294901760
    %320 = vmatpush.msra.mxu0 %v319
    %v321 = vand.u32 %v56, 4294901760
    %v322 = vsub.f32 %v56, %v321
    %v323 = vand.u32 %v322, 4294901760
    %324 = vmatpush.msra.mxu0 %v323
    %v325 = vand.u32 %v55, 4294901760
    %v326 = vsub.f32 %v55, %v325
    %v327 = vand.u32 %v326, 4294901760
    %328 = vmatpush.msra.mxu0 %v327
    %v329 = vand.u32 %v54, 4294901760
    %v330 = vsub.f32 %v54, %v329
    %v331 = vand.u32 %v330, 4294901760
    %332 = vmatpush.msra.mxu0 %v331
    %v333 = vand.u32 %v53, 4294901760
    %v334 = vsub.f32 %v53, %v333
    %v335 = vand.u32 %v334, 4294901760
    %336 = vmatpush.msra.mxu0 %v335
    %v337 = vand.u32 %v52, 4294901760
    %v338 = vsub.f32 %v52, %v337
    %v339 = vand.u32 %v338, 4294901760
    %340 = vmatpush.msra.mxu0 %v339
    %v341 = vand.u32 %v51, 4294901760
    %v342 = vsub.f32 %v51, %v341
    %v343 = vand.u32 %v342, 4294901760
    %344 = vmatpush.msra.mxu0 %v343
    %v345 = vand.u32 %v50, 4294901760
    %v346 = vsub.f32 %v50, %v345
    %v347 = vand.u32 %v346, 4294901760
    %348 = vmatpush.msra.mxu0 %v347
    %v349 = vand.u32 %v49, 4294901760
    %v350 = vsub.f32 %v49, %v349
    %v351 = vand.u32 %v350, 4294901760
    %352 = vmatpush.msra.mxu0 %v351
    %v353 = vand.u32 %v48, 4294901760
    %v354 = vsub.f32 %v48, %v353
    %v355 = vand.u32 %v354, 4294901760
    %356 = vmatpush.msra.mxu0 %v355
    %v357 = vand.u32 %v47, 4294901760
    %v358 = vsub.f32 %v47, %v357
    %v359 = vand.u32 %v358, 4294901760
    %360 = vmatpush.msra.mxu0 %v359
    %v361 = vand.u32 %v46, 4294901760
    %v362 = vsub.f32 %v46, %v361
    %v363 = vand.u32 %v362, 4294901760
    %364 = vmatpush.msra.mxu0 %v363
    %v365 = vand.u32 %v45, 4294901760
    %366 = vmatmul.f32.gmra.mxu0 %v365
    %v367 = vpop.f32.mrf.mxu0
    %v368 = vadd.f32 %v299, %v367
    %369 = vdwg.mxu0
    %v370 = vand.u32 %v61, 4294901760
    %371 = vmatpush.msra.mxu0 %v370
    %v372 = vand.u32 %v60, 4294901760
    %373 = vmatpush.msra.mxu0 %v372
    %v374 = vand.u32 %v59, 4294901760
    %375 = vmatpush.msra.mxu0 %v374
    %v376 = vand.u32 %v58, 4294901760
    %377 = vmatpush.msra.mxu0 %v376
    %v378 = vand.u32 %v57, 4294901760
    %379 = vmatpush.msra.mxu0 %v378
    %v380 = vand.u32 %v56, 4294901760
    %381 = vmatpush.msra.mxu0 %v380
    %v382 = vand.u32 %v55, 4294901760
    %383 = vmatpush.msra.mxu0 %v382
    %v384 = vand.u32 %v54, 4294901760
    %385 = vmatpush.msra.mxu0 %v384
    %v386 = vand.u32 %v53, 4294901760
    %387 = vmatpush.msra.mxu0 %v386
    %v388 = vand.u32 %v52, 4294901760
    %389 = vmatpush.msra.mxu0 %v388
    %v390 = vand.u32 %v51, 4294901760
    %391 = vmatpush.msra.mxu0 %v390
    %v392 = vand.u32 %v50, 4294901760
    %393 = vmatpush.msra.mxu0 %v392
    %v394 = vand.u32 %v49, 4294901760
    %395 = vmatpush.msra.mxu0 %v394
    %v396 = vand.u32 %v48, 4294901760
    %397 = vmatpush.msra.mxu0 %v396
    %v398 = vand.u32 %v47, 4294901760
    %399 = vmatpush.msra.mxu0 %v398
    %v400 = vand.u32 %v46, 4294901760
    %401 = vmatpush.msra.mxu0 %v400
    %v402 = vand.u32 %v45, 4294901760
    %403 = vmatmul.f32.gmra.mxu0 %v402
    %v404 = vpop.f32.mrf.mxu0
    %v405 = vadd.f32 %v368, %v404
    %406 = vdwg.mxu0
    %407 = vst [vmem:[#allocation7] sm:$0xff] %v405
    // Predicated region
    $region22: #{tpu_custom_call.1} parent=1 // pred_check
      _
    $region23: #{tpu_custom_call.1} parent=1 // pred_check_branch
      %409 = sbr.rel (0) target = $region25
    $region24: #{tpu_custom_call.1} parent=1 // pred_region
      %411 = vsyncadd [#allocation4], 0
      %s413 = sshll.u32 [#allocation7], 4
      %s414 = int_to_ptr.vmem [resolvable:$true] %s413
      %s415 = sshll.u32 %s3, 4
      %s416 = int_to_ptr.hbm [resolvable:$true] %s415
      %418 = dma.vmem_to_hbm [thread:$0]  %s414, 128, %s416, [#allocation4]
    $region25: #{tpu_custom_call.1} parent=1 // pred_fallthru
      _
    // Predicated region
    $region26: #{tpu_custom_call.1} parent=1 // pred_check
      _
    $region27: #{tpu_custom_call.1} parent=1 // pred_check_branch
      %420 = sbr.rel (0) target = $region29
    $region28: #{tpu_custom_call.1} parent=1 // pred_region
      %422 = dma.done [#allocation4], 128
    $region29: #{tpu_custom_call.1} parent=1 // pred_fallthru
      _
    %423 = vsyncpa [#allocation3], 1
    %424 = vsyncpa [#allocation6], 1
    %425 = vsyncpa [#allocation4], 1

</llo_original>
